<compile_context>
chip_gen: v7x
topology: tpu7x:2x2x1
jax: 0.10.0
libtpu: 0.0.40
codegen_flags: <defaults>
</compile_context>

<pallas_src>
import functools
import math

import jax
import jax.numpy as jnp
from jax.experimental import pallas as pl
from jax.experimental.pallas import tpu as pltpu


# ----------------------------------------------------------------------------
# Kernel bodies
# ----------------------------------------------------------------------------

def _copy_kernel(x_ref, o_ref):
    # Pure data movement: the permutation is expressed entirely in the
    # BlockSpec index_maps.
    o_ref[...] = x_ref[...]


def _reshape_copy_kernel(x_ref, o_ref):
    # Block (1, cb, H, W) -> (cb, 1, H, W): one of the swapped dims is 1, so
    # this is a free reshape (no data movement, no XLU work).
    o_ref[...] = x_ref[...].reshape(o_ref.shape)


def _transpose_kernel(x_ref, o_ref, *, perm):
    # Block-local transpose.  The wrapper keeps the output block's last dim
    # full-extent (lane-dense) and aligns every tiled sublane dim to the
    # dtype's packed sublane size, so this lowers to clean relayouts.
    o_ref[...] = jnp.transpose(x_ref[...], perm)


def _merge_transpose_kernel(x_ref, o_ref):
    # (1, C, hb, W) -> (1, hb, C, W) -> (1, hb, C*W): merged last dim makes
    # the store a single lane-dense (unmasked) vst even when W < 128.
    t = jnp.transpose(x_ref[...], (0, 2, 1, 3))
    o_ref[...] = t.reshape(o_ref.shape)


# ----------------------------------------------------------------------------
# Sizing helpers
# ----------------------------------------------------------------------------

def _sublane_align(dtype):
    # Packed dtypes tile sublanes in groups: f32 [8,128], bf16 [16,128],
    # int8/fp8 [32,128].  Aligning tiled sublane dims to the packed size keeps
    # vld/vst unmasked (matters most on v5e's single vector-store slot).
    return max(8, 32 // jnp.dtype(dtype).itemsize)


def _input_align(axis, sub_align):
    # Alignment required when an INPUT axis is tiled (not full-extent).
    return (1, 1, sub_align, 128)[axis]


def _block_target_bytes():
    """Per-generation block byte target (soft) for this HBM-bound copy.

    ~2 MiB blocks reach the ~85% HBM-roofline knee on v5e/v6e; v7x's
    ~3.2 TB/s HBM needs ~4 MiB to keep per-step overhead (~0.35 us) hidden.
    Resident VMEM ~= 4 x block (in + out, double-buffered): 8 / 16 MiB --
    inside every generation's default scoped VMEM limit.
    """
    try:
        info = pltpu.get_tpu_info()
        vmem = int(getattr(info, "vmem_capacity_bytes", 128 << 20))
    except Exception:  # pragma: no cover - CPU / interpret / old runtime
        vmem = 128 << 20
    if vmem <= (64 << 20):          # v7x-class: 64 MiB physical VMEM per TC
        return 4 << 20
    return 2 << 20                  # v5e / v6e


def _tile(extent, unit_bytes, align, target_bytes):
    """Largest `align`-multiple tile with tile*unit_bytes ~<= target_bytes.

    A tile equal to `extent` is exempt from the alignment rule (full-extent
    block dims are always legal).
    """
    extent = int(extent)
    if extent <= align:
        return extent
    t = max(1, target_bytes // max(unit_bytes, 1))
    t = (min(t, extent) // align) * align
    t = max(align, t)
    if t >= extent:
        return extent
    return t


# ----------------------------------------------------------------------------
# Specialized paths
# ----------------------------------------------------------------------------

def _permute_leading_swap(x, target):
    """perm == (1, 0, 2, 3): copy-only, permutation entirely in index_maps."""
    n, c, h, w = x.shape
    item = x.dtype.itemsize
    plane = h * w * item

    if plane <= target:
        # Block over C with full (H, W) planes: each step moves ~target bytes,
        # and the (1, cb, H, W) -> (cb, 1, H, W) "transpose" is a free reshape.
        cb = max(1, min(c, target // max(plane, 1)))
        grid = (n, pl.cdiv(c, cb))
        return pl.pallas_call(
            _reshape_copy_kernel,
            out_shape=jax.ShapeDtypeStruct((c, n, h, w), x.dtype),
            grid=grid,
            in_specs=[pl.BlockSpec((1, cb, h, w), lambda i, j: (i, j, 0, 0))],
            out_specs=pl.BlockSpec((cb, 1, h, w), lambda i, j: (j, i, 0, 0)),
            compiler_params=pltpu.CompilerParams(
                dimension_semantics=("parallel", "parallel")),
        )(x)

    # Large (H, W) plane: tile H (sublane-aligned) instead; still a plain copy.
    align_h = _sublane_align(x.dtype)
    hb = _tile(h, w * item, align_h, target)
    grid = (n, c, pl.cdiv(h, hb))
    return pl.pallas_call(
        _copy_kernel,
        out_shape=jax.ShapeDtypeStruct((c, n, h, w), x.dtype),
        grid=grid,
        in_specs=[pl.BlockSpec((1, 1, hb, w), lambda i, j, k: (i, j, k, 0))],
        out_specs=pl.BlockSpec((1, 1, hb, w), lambda i, j, k: (j, i, k, 0)),
        compiler_params=pltpu.CompilerParams(
            dimension_semantics=("parallel", "parallel", "parallel")),
    )(x)


def _permute_middle_swap_narrow(x, target):
    """perm == (0, 2, 1, 3) with W < 128: lane-dense merged (N, H, C*W) output."""
    n, c, h, w = x.shape
    item = x.dtype.itemsize
    align_h = _sublane_align(x.dtype)

    if c * w * item * align_h > 2 * target:
        # TODO(synk): huge C*W rows with narrow W -- bounded-VMEM general path
        # (masked stores) instead of an oversized merged block.
        return _permute_general(x, (0, 2, 1, 3), target)

    hb = _tile(h, c * w * item, align_h, target)
    grid = (n, pl.cdiv(h, hb))
    out_flat = pl.pallas_call(
        _merge_transpose_kernel,
        out_shape=jax.ShapeDtypeStruct((n, h, c * w), x.dtype),
        grid=grid,
        in_specs=[pl.BlockSpec((1, c, hb, w), lambda i, j: (i, 0, j, 0))],
        out_specs=pl.BlockSpec((1, hb, c * w), lambda i, j: (i, j, 0)),
        compiler_params=pltpu.CompilerParams(
            dimension_semantics=("parallel", "parallel")),
    )(x)
    return out_flat.reshape(n, h, c, w)


def _permute_general(x, perm, target):
    """Any permutation: tile output axes 0..2 (inner-first), transpose in-kernel.

    The output lane axis (3) is never tiled, so stores stay lane-dense; tiled
    sublane / lane dims on either side are aligned to their packed sizes.
    """
    in_shape = x.shape
    out_shape = tuple(in_shape[p] for p in perm)
    item = x.dtype.itemsize
    sub = _sublane_align(x.dtype)

    tiles = [None, None, None, out_shape[3]]
    unit = out_shape[3] * item
    for k in (2, 1, 0):                        # innermost tiled first
        a = perm[k]                            # corresponding input axis
        out_align = sub if k == 2 else 1
        align = math.lcm(out_align, _input_align(a, sub))
        t = _tile(out_shape[k], unit, align, target)
        tiles[k] = t
        unit *= t
    out_block = tuple(tiles)
    in_block = tuple(out_block[perm.index(d)] for d in range(4))
    grid = tuple(pl.cdiv(out_shape[k], out_block[k]) for k in range(3))

    def in_index(i0, i1, i2, _perm=perm):
        g = (i0, i1, i2, 0)                    # block index per OUTPUT axis
        idx = [0, 0, 0, 0]
        for k in range(4):
            idx[_perm[k]] = g[k]
        return tuple(idx)

    def out_index(i0, i1, i2):
        return (i0, i1, i2, 0)

    return pl.pallas_call(
        functools.partial(_transpose_kernel, perm=perm),
        out_shape=jax.ShapeDtypeStruct(out_shape, x.dtype),
        grid=grid,
        in_specs=[pl.BlockSpec(in_block, in_index)],
        out_specs=pl.BlockSpec(out_block, out_index),
        compiler_params=pltpu.CompilerParams(
            dimension_semantics=("parallel", "parallel", "parallel")),
    )(x)


# ----------------------------------------------------------------------------
# Public wrapper (== Permute2d(perm)(x))
# ----------------------------------------------------------------------------

def permute2d(x, perm, *, force_pallas=False, small_bytes=1 << 17,
              block_target_bytes=None):
    """Pallas equivalent of Permute2d(perm)(x) for a 4-D array."""
    perm = tuple(int(p) for p in perm)
    assert x.ndim == 4 and sorted(perm) == [0, 1, 2, 3]

    if perm == (0, 1, 2, 3):
        return x                                   # identity permutation

    # Tiny tensors (CLEEGN's actual activations): a standalone kernel is pure
    # launch/step overhead -- use XLA's transpose.
    # TODO(synk): the true optimum for CLEEGN is fusing this axis reorder into
    # the consumer kernel's BlockSpec index_map.
    if not force_pallas and x.size * x.dtype.itemsize < small_bytes:
        return jnp.transpose(x, perm)

    target = block_target_bytes or _block_target_bytes()

    if perm == (1, 0, 2, 3):
        return _permute_leading_swap(x, target)
    if perm == (0, 2, 1, 3) and x.shape[3] < 128:
        return _permute_middle_swap_narrow(x, target)
    return _permute_general(x, perm, target)


if __name__ == "__main__":
    key = jax.random.PRNGKey(0)
    k0, k1 = jax.random.split(key)

    # CLEEGN-style NCHW input and CLEEGN's Permute2d((0, 2, 1, 3)).
    x_small = jax.random.normal(k0, (2, 4, 16, 16), dtype=jnp.float32)
    perm = (0, 2, 1, 3)

    # Default dispatch: tiny tensor -> plain transpose (overhead-dominated).
    y_auto = jax.block_until_ready(permute2d(x_small, perm))
    assert jnp.array_equal(y_auto, jnp.transpose(x_small, perm))

    # Forced Pallas: narrow-W merged-output path (lane-dense stores).
    y = jax.block_until_ready(permute2d(x_small, perm, force_pallas=True))
    assert y.shape == (2, 16, 4, 16), y.shape
    assert jnp.array_equal(y, jnp.transpose(x_small, perm))

    # Copy-only (pure DMA re-addressing) leading-swap path.
    y_sw = jax.block_until_ready(
        permute2d(x_small, (1, 0, 2, 3), force_pallas=True))
    assert jnp.array_equal(y_sw, jnp.transpose(x_small, (1, 0, 2, 3)))

    # General path: last-two-dims transpose.
    y_hw = jax.block_until_ready(
        permute2d(x_small, (0, 1, 3, 2), force_pallas=True))
    assert jnp.array_equal(y_hw, jnp.transpose(x_small, (0, 1, 3, 2)))

    # General path: a major-axis rotation.
    y_gen = jax.block_until_ready(
        permute2d(x_small, (2, 0, 1, 3), force_pallas=True))
    assert jnp.array_equal(y_gen, jnp.transpose(x_small, (2, 0, 1, 3)))

    # Larger, lane-dense case (W = 128): tiled general path, ~2 MiB blocks.
    x_big = jax.random.normal(k1, (2, 8, 512, 128), dtype=jnp.float32)
    y_big = jax.block_until_ready(permute2d(x_big, perm))
    assert jnp.array_equal(y_big, jnp.transpose(x_big, perm))

    # bf16 exercises the dtype-aware (16-row packed) sublane alignment.
    x_bf = x_big.astype(jnp.bfloat16)
    y_bf = jax.block_until_ready(permute2d(x_bf, perm))
    assert jnp.array_equal(y_bf, jnp.transpose(x_bf, perm))

    print("KERNEL_OK")
</pallas_src>

<mosaic_0001>
module attributes {stable_mosaic.version = 11 : i64} {
  func.func @_merge_transpose_kernel(%arg0: i32, %arg1: i32, %arg2: memref<1x4x16x16xf32, #tpu.memory_space<vmem>>, %arg3: memref<1x16x64xf32, #tpu.memory_space<vmem>>) attributes {dimension_semantics = [#tpu.dimension_semantics<parallel>, #tpu.dimension_semantics<parallel>], iteration_bounds = array<i64: 2, 1>, scalar_prefetch = 0 : i64, scratch_operands = 0 : i64, tpu.core_type = #tpu.core_type<tc>, window_params = [{transform_indices = @transform_0, window_bounds = array<i64: 1, 4, 16, 16>}, {transform_indices = @transform_1, window_bounds = array<i64: 1, 16, 64>}]} {
    %c0 = arith.constant 0 : index
    %c0_0 = arith.constant 0 : index
    %c0_1 = arith.constant 0 : index
    %c0_2 = arith.constant 0 : index
    %0 = vector.load %arg2[%c0, %c0_0, %c0_1, %c0_2] : memref<1x4x16x16xf32, #tpu.memory_space<vmem>>, vector<1x4x16x16xf32>
    %1 = tpu.transpose %0, [0, 2, 1, 3] : vector<1x4x16x16xf32> -> vector<1x16x4x16xf32>
    %2 = vector.shape_cast %1 : vector<1x16x4x16xf32> to vector<1x16x64xf32>
    %c0_3 = arith.constant 0 : index
    %c0_4 = arith.constant 0 : index
    %c0_5 = arith.constant 0 : index
    %3 = vector.load %arg3[%c0_3, %c0_4, %c0_5] : memref<1x16x64xf32, #tpu.memory_space<vmem>>, vector<1x16x64xf32>
    tpu.vector_store %arg3[%c0_3, %c0_4, %c0_5], %2 {strides = array<i32>} : memref<1x16x64xf32, #tpu.memory_space<vmem>>, vector<1x16x64xf32>,
    return
  }
  func.func @transform_0(%arg0: i32, %arg1: i32) -> (i32, i32, i32, i32) {
    %c0_i32 = arith.constant 0 : i32
    %c0_i32_0 = arith.constant 0 : i32
    %c0_i32_1 = arith.constant 0 : i32
    return %arg0, %c0_i32, %arg1, %c0_i32_0 : i32, i32, i32, i32
  }
  func.func @transform_1(%arg0: i32, %arg1: i32) -> (i32, i32, i32) {
    %c0_i32 = arith.constant 0 : i32
    %c0_i32_0 = arith.constant 0 : i32
    return %arg0, %arg1, %c0_i32 : i32, i32, i32
  }
}

</mosaic_0001>

<llo_original>
// kernel: tpu_custom_call.1
$region0: #{tpu_custom_call.1}
  #allocation0 [shape = 'u32[]', space=smem, size = 0x4, offset = 0x4, fixed_abs, tag = 'smem constant byte address 0x4 - core index']
  #allocation1 [shape = 'u32[144,128]{1,0:T(1,128)}', space=vmem, size = 0x12000, scoped, tag = 'internal scratch']
  %s0 = inlined_call_operand.hbm [shape: f32[2,4,16,16], index: 0, kind: input, shape index: {}]
  %s1 = inlined_call_operand.hbm [shape: f32[2,16,64], index: 1, kind: output, shape index: {}]
  %s2 = sld [smem:[#allocation0]]
  $region41: #{tpu_custom_call.1} parent=0
    _
  %s4 = ssub.s32 1, %s2
  %s5 = scalar_select 0, %s4, %s2
  $region1: #{tpu_custom_call.1} parent=0
    #allocation2 [shape = 'u8[65536]{0}', space=vmem, size = 0x10000, scoped, tag = 'input window, operand 0']
    #allocation3 [shape = 's32[2]{0}', space=sflag, size = 0x8, scoped, tag = 'scoped memory for tpu_custom_call.1']
    #allocation4 [shape = 's32[2]{0}', space=sflag, size = 0x8, scoped, tag = 'scoped memory for tpu_custom_call.1']
    #allocation5 [shape = 'u8[16384]{0}', space=vmem, size = 0x4000, scoped, tag = 'output window, operand 0']
    %6 = vsyncpa [#allocation3], 0
    %s7 = scalar_lea.sflag [#allocation3], 1
    %8 = vsyncpa %s7, 0
    %9 = vsyncpa [#allocation4], 0
    %s10 = scalar_lea.sflag [#allocation4], 1
    %11 = vsyncpa %s10, 0
    loop: start=0, step=1, limit=4
    $region2: #{tpu_custom_call.1} parent=1 // loop_pre_header
      _
    $region3: #{tpu_custom_call.1} parent=1 // loop_header
      %s13 = sphi 0, %s17
      %p14 = scmp.ge.s32.totalorder %s13, 4
      %s20 = sphi 0, %s32
      %s21 = sphi 0, %s28
      %s22 = sphi 0, %s20
      %s23 = sphi 0, %s21
      %s24 = sphi 0, %s22
      %s25 = sphi 0, %s23
      %s37 = sphi 0, %s39
      %s40 = sphi 0, %s37
      %s41 = sphi 0, %s40
      %s57 = sphi 0, %s41
      %s65 = sphi 0, %s67
      %s68 = sphi 0, %s65
      %s69 = sphi 0, %s68
      %s85 = sphi 0, %s69
    $region4: #{tpu_custom_call.1} parent=1 // loop_header_branch
      %16 = sbr.rel (%p14) target = $region8
    $region5: #{tpu_custom_call.1} parent=1 // loop_body
      %s18 = ssub.s32 %s13, 1
      %s19 = ssub.s32 %s13, 2
      %s26 = sadd.s32 1, %s21
      %p27 = scmp.ge.s32.totalorder %s26, 1
      %s28 = scalar_select %p27, 0, %s26
      %s29 = sadd.s32 1, %s20
      %s30 = scalar_select %p27, %s29, %s20
      %p31 = scmp.ge.s32.totalorder %s30, 2
      %s32 = scalar_select %p31, 0, %s30
      %s33 = ssub.s32 %s20, %s32
      %s34 = ssub.s32 %s21, %s28
      %s35 = sor.u32 %s33, %s34
      %p36 = scmp.eq.s32.totalorder %s35, 0
      %s38 = sadd.s32 %s37, 1
      %s39 = scalar_select %p36, %s37, %s38
      %p42 = pneg %p36
      %p43 = scmp.eq.s32.totalorder %s13, 1
      %p44 = por %p42, %p43
      %p45 = scmp.ne.s32.totalorder %s37, %s40
      %p46 = scmp.eq.s32.totalorder %s13, 0
      %p47 = por %p45, %p46
      %p48 = scmp.ne.s32.totalorder %s37, %s40
      %p49 = scmp.eq.s32.totalorder %s18, 1
      %p50 = por %p48, %p49
      %p51 = scmp.ne.s32.totalorder %s40, %s41
      %p52 = scmp.eq.s32.totalorder %s18, 0
      %p53 = por %p51, %p52
      %p54 = scmp.ne.s32.totalorder %s40, %s41
      %p55 = scmp.eq.s32.totalorder %s19, 1
      %p56 = por %p54, %p55
      %p58 = scmp.ne.s32.totalorder %s41, %s57
      %p59 = scmp.eq.s32.totalorder %s19, 0
      %p60 = por %p58, %p59
      %s61 = ssub.s32 %s20, %s32
      %s62 = ssub.s32 %s21, %s28
      %s63 = sor.u32 %s61, %s62
      %p64 = scmp.eq.s32.totalorder %s63, 0
      %s66 = sadd.s32 %s65, 1
      %s67 = scalar_select %p64, %s65, %s66
      %p70 = pneg %p64
      %p71 = scmp.eq.s32.totalorder %s13, 1
      %p72 = por %p70, %p71
      %p73 = scmp.ne.s32.totalorder %s65, %s68
      %p74 = scmp.eq.s32.totalorder %s13, 0
      %p75 = por %p73, %p74
      %p76 = scmp.ne.s32.totalorder %s65, %s68
      %p77 = scmp.eq.s32.totalorder %s18, 1
      %p78 = por %p76, %p77
      %p79 = scmp.ne.s32.totalorder %s68, %s69
      %p80 = scmp.eq.s32.totalorder %s18, 0
      %p81 = por %p79, %p80
      %p82 = scmp.ne.s32.totalorder %s68, %s69
      %p83 = scmp.eq.s32.totalorder %s19, 1
      %p84 = por %p82, %p83
      %p86 = scmp.ne.s32.totalorder %s69, %s85
      %p87 = scmp.eq.s32.totalorder %s19, 0
      %p88 = por %p86, %p87
      %p89 = scmp.le.s32.totalorder 1, %s13
      %p90 = scmp.lt.s32.totalorder %s13, 3
      %p91 = pnand %p89, %p90
      %p92 = pneg %p91
      // Predicated region
      $region9: #{tpu_custom_call.1} parent=5 // pred_check
        _
      $region10: #{tpu_custom_call.1} parent=5 // pred_check_branch
        %94 = sbr.rel (%p91) target = $region12
      $region11: #{tpu_custom_call.1} parent=5 // pred_region
        %s95 = ssub.s32 %s13, 1
      $region12: #{tpu_custom_call.1} parent=5 // pred_fallthru
        _
      %p96 = scmp.lt.s32.totalorder %s13, 2
      // Predicated region
      $region13: #{tpu_custom_call.1} parent=5 // pred_check
        %p97 = pneg %p96
      $region14: #{tpu_custom_call.1} parent=5 // pred_check_branch
        %99 = sbr.rel (%p97) target = $region16
      $region15: #{tpu_custom_call.1} parent=5 // pred_region
        // Predicated region
        $region17: #{tpu_custom_call.1} parent=15 // pred_check
          %p100 = pneg %p47
        $region18: #{tpu_custom_call.1} parent=15 // pred_check_branch
          %102 = sbr.rel (%p100) target = $region20
        $region19: #{tpu_custom_call.1} parent=15 // pred_region
          %s103 = sand.u32 %s37, 1
          %s104 = scalar_lea.sflag [#allocation3], %s103
          %s105 = sand.u32 %s37, 1
          %s106 = smul.addr %s105, 64
          %s107 = scalar_lea.vmem [#allocation2], %s106
          %s108 = smul.u32 2, %s21
          %s110 = ssub.s32 1024, 1024
          %111 = vsyncadd %s104, %s110
          %s112 = smul.addr %s20, 8
          %s113 = sadd.s32 %s108, %s112
          %s114 = smul.addr %s113, 128
          %s115 = scalar_lea.hbm %s0, %s114
          %s116 = sshll.u32 %s107, 4
          %s117 = int_to_ptr.vmem [resolvable:$true] %s116
          %122 = dma.hbm_to_vmem [thread:$0]  %s115, 1024, %s117, %s104, 128, 128, 8
        $region20: #{tpu_custom_call.1} parent=15 // pred_fallthru
          _
      $region16: #{tpu_custom_call.1} parent=5 // pred_fallthru
        _
      %p123 = scmp.le.s32.totalorder 1, %s13
      %p124 = scmp.lt.s32.totalorder %s13, 3
      %p125 = pnand %p123, %p124
      %p126 = pneg %p125
      // Predicated region
      $region21: #{tpu_custom_call.1} parent=5 // pred_check
        _
      $region22: #{tpu_custom_call.1} parent=5 // pred_check_branch
        %128 = sbr.rel (%p125) target = $region24
      $region23: #{tpu_custom_call.1} parent=5 // pred_region
        %s129 = ssub.s32 %s13, 1
        %s130 = sand.u32 %s40, 1
        %s131 = scalar_lea.sflag [#allocation3], %s130
        %s132 = sand.u32 %s40, 1
        %s133 = smul.addr %s132, 64
        %s134 = scalar_lea.vmem [#allocation2], %s133
        // Predicated region
        $region25: #{tpu_custom_call.1} parent=23 // pred_check
          %p135 = pneg %p53
        $region26: #{tpu_custom_call.1} parent=23 // pred_check_branch
          %137 = sbr.rel (%p135) target = $region28
        $region27: #{tpu_custom_call.1} parent=23 // pred_region
          %138 = dma.done %s131, 1024
        $region28: #{tpu_custom_call.1} parent=23 // pred_fallthru
          _
        %s139 = sand.u32 %s40, 1
        %s140 = scalar_lea.sflag [#allocation3], %s139
        %s141 = sand.u32 %s40, 1
        %s142 = smul.addr %s141, 64
        %s143 = scalar_lea.vmem [#allocation2], %s142
        %p144 = pneg %p53
        %p145 = pneg %p50
        %p146 = pneg %p81
        %p147 = pneg %p78
        %s148 = sand.u32 %s68, 1
        %s149 = scalar_lea.sflag [#allocation4], %s148
        %s150 = sand.u32 %s68, 1
        %s151 = smul.addr %s150, 16
        %s152 = scalar_lea.vmem [#allocation5], %s151
        %s153 = smul.u32 2, %s23
        %s154 = smul.u32 2, %s23
        %v155 = vld [vmem:[%s134] sm:$0xff]
        %v156 = vld [vmem:[%s134 + $0x8] sm:$0xff]
        %v157 = vld [vmem:[%s134 + $0x10] sm:$0xff]
        %v158 = vld [vmem:[%s134 + $0x18] sm:$0xff]
        %v159 = vld [vmem:[%s134 + $0x20] sm:$0xff]
        %v160 = vld [vmem:[%s134 + $0x28] sm:$0xff]
        %v161 = vld [vmem:[%s134 + $0x30] sm:$0xff]
        %v162 = vld [vmem:[%s134 + $0x38] sm:$0xff]
        %v163 = vcombine.low %v155, %v159
        %v164 = vcombine.high %v155, %v159
        %v166 = vunpack.c.l.s4 1983009808
        %v167 = vunpack.c.0.s8 %v166
        %v168 = vlaneseq
        %v169 = vshrl.u32 %v168, 7
        %v170 = vsub.s32 %v167, %v169
        %v171 = vrot.slane %v163, %v170
        %v173 = vunpack.c.l.s4 1983009808
        %v174 = vunpack.c.0.s8 %v173
        %v175 = vlaneseq
        %v176 = vshrl.u32 %v175, 7
        %v177 = vsub.s32 %v174, %v176
        %v178 = vrot.slane %v164, %v177
        %v179 = vcombine.low %v157, %v161
        %v180 = vcombine.high %v157, %v161
        %v182 = vunpack.c.l.s4 1983009808
        %v183 = vunpack.c.0.s8 %v182
        %v184 = vlaneseq
        %v185 = vshrl.u32 %v184, 7
        %v186 = vsub.s32 %v183, %v185
        %v187 = vrot.slane %v179, %v186
        %v189 = vunpack.c.l.s4 1983009808
        %v190 = vunpack.c.0.s8 %v189
        %v191 = vlaneseq
        %v192 = vshrl.u32 %v191, 7
        %v193 = vsub.s32 %v190, %v192
        %v194 = vrot.slane %v180, %v193
        %v195 = vcombine.low %v171, %v187
        %v196 = vcombine.high %v171, %v187
        %v198 = vunpack.c.l.s4 1934713408
        %v199 = vunpack.c.0.s8 %v198
        %v200 = vlaneseq
        %v201 = vshrl.u32 %v200, 7
        %v202 = vsub.s32 %v199, %v201
        %v203 = vrot.slane %v195, %v202
        %v205 = vunpack.c.l.s4 1934713408
        %v206 = vunpack.c.0.s8 %v205
        %v207 = vlaneseq
        %v208 = vshrl.u32 %v207, 7
        %v209 = vsub.s32 %v206, %v208
        %v210 = vrot.slane %v196, %v209
        %v211 = vcombine.low %v178, %v194
        %v212 = vcombine.high %v178, %v194
        %v214 = vunpack.c.l.s4 1934713408
        %v215 = vunpack.c.0.s8 %v214
        %v216 = vlaneseq
        %v217 = vshrl.u32 %v216, 7
        %v218 = vsub.s32 %v215, %v217
        %v219 = vrot.slane %v211, %v218
        %v221 = vunpack.c.l.s4 1934713408
        %v222 = vunpack.c.0.s8 %v221
        %v223 = vlaneseq
        %v224 = vshrl.u32 %v223, 7
        %v225 = vsub.s32 %v222, %v224
        %v226 = vrot.slane %v212, %v225
        %v227 = vcombine.high %v203, 0.0
        %v228 = vcombine.high %v210, 0.0
        %v229 = vcombine.high %v219, 0.0
        %v230 = vcombine.high %v226, 0.0
        %v231 = vcombine.low %v156, %v160
        %v232 = vcombine.high %v156, %v160
        %v234 = vunpack.c.l.s4 1983009808
        %v235 = vunpack.c.0.s8 %v234
        %v236 = vlaneseq
        %v237 = vshrl.u32 %v236, 7
        %v238 = vsub.s32 %v235, %v237
        %v239 = vrot.slane %v231, %v238
        %v241 = vunpack.c.l.s4 1983009808
        %v242 = vunpack.c.0.s8 %v241
        %v243 = vlaneseq
        %v244 = vshrl.u32 %v243, 7
        %v245 = vsub.s32 %v242, %v244
        %v246 = vrot.slane %v232, %v245
        %v247 = vcombine.low %v158, %v162
        %v248 = vcombine.high %v158, %v162
        %v250 = vunpack.c.l.s4 1983009808
        %v251 = vunpack.c.0.s8 %v250
        %v252 = vlaneseq
        %v253 = vshrl.u32 %v252, 7
        %v254 = vsub.s32 %v251, %v253
        %v255 = vrot.slane %v247, %v254
        %v257 = vunpack.c.l.s4 1983009808
        %v258 = vunpack.c.0.s8 %v257
        %v259 = vlaneseq
        %v260 = vshrl.u32 %v259, 7
        %v261 = vsub.s32 %v258, %v260
        %v262 = vrot.slane %v248, %v261
        %v263 = vcombine.low %v239, %v255
        %v264 = vcombine.high %v239, %v255
        %v266 = vunpack.c.l.s4 1934713408
        %v267 = vunpack.c.0.s8 %v266
        %v268 = vlaneseq
        %v269 = vshrl.u32 %v268, 7
        %v270 = vsub.s32 %v267, %v269
        %v271 = vrot.slane %v263, %v270
        %v273 = vunpack.c.l.s4 1934713408
        %v274 = vunpack.c.0.s8 %v273
        %v275 = vlaneseq
        %v276 = vshrl.u32 %v275, 7
        %v277 = vsub.s32 %v274, %v276
        %v278 = vrot.slane %v264, %v277
        %v279 = vcombine.low %v246, %v262
        %v280 = vcombine.high %v246, %v262
        %v282 = vunpack.c.l.s4 1934713408
        %v283 = vunpack.c.0.s8 %v282
        %v284 = vlaneseq
        %v285 = vshrl.u32 %v284, 7
        %v286 = vsub.s32 %v283, %v285
        %v287 = vrot.slane %v279, %v286
        %v289 = vunpack.c.l.s4 1934713408
        %v290 = vunpack.c.0.s8 %v289
        %v291 = vlaneseq
        %v292 = vshrl.u32 %v291, 7
        %v293 = vsub.s32 %v290, %v292
        %v294 = vrot.slane %v280, %v293
        %v295 = vcombine.high %v271, 0.0
        %v296 = vcombine.high %v278, 0.0
        %v297 = vcombine.high %v287, 0.0
        %v298 = vcombine.high %v294, 0.0
        %v299 = vcombine.low %v203, %v210
        %v301 = vunpack.c.l.s4 1983009808
        %v302 = vunpack.c.0.s8 %v301
        %v303 = vlaneseq
        %v304 = vshrl.u32 %v303, 7
        %v305 = vsub.s32 %v302, %v304
        %v306 = vrot.slane %v299, %v305
        %v307 = vcombine.low %v227, %v228
        %v309 = vunpack.c.l.s4 1983009808
        %v310 = vunpack.c.0.s8 %v309
        %v311 = vlaneseq
        %v312 = vshrl.u32 %v311, 7
        %v313 = vsub.s32 %v310, %v312
        %v314 = vrot.slane %v307, %v313
        %v315 = vcombine.low %v219, %v226
        %v317 = vunpack.c.l.s4 1983009808
        %v318 = vunpack.c.0.s8 %v317
        %v319 = vlaneseq
        %v320 = vshrl.u32 %v319, 7
        %v321 = vsub.s32 %v318, %v320
        %v322 = vrot.slane %v315, %v321
        %v323 = vcombine.low %v229, %v230
        %v325 = vunpack.c.l.s4 1983009808
        %v326 = vunpack.c.0.s8 %v325
        %v327 = vlaneseq
        %v328 = vshrl.u32 %v327, 7
        %v329 = vsub.s32 %v326, %v328
        %v330 = vrot.slane %v323, %v329
        %v331 = vcombine.low %v306, %v314
        %v332 = vcombine.high %v306, %v314
        %v334 = vunpack.c.l.s4 1934713408
        %v335 = vunpack.c.0.s8 %v334
        %v336 = vlaneseq
        %v337 = vshrl.u32 %v336, 7
        %v338 = vsub.s32 %v335, %v337
        %v339 = vrot.slane %v331, %v338
        %v341 = vunpack.c.l.s4 1934713408
        %v342 = vunpack.c.0.s8 %v341
        %v343 = vlaneseq
        %v344 = vshrl.u32 %v343, 7
        %v345 = vsub.s32 %v342, %v344
        %v346 = vrot.slane %v332, %v345
        %v347 = vcombine.low %v322, %v330
        %v348 = vcombine.high %v322, %v330
        %v350 = vunpack.c.l.s4 1934713408
        %v351 = vunpack.c.0.s8 %v350
        %v352 = vlaneseq
        %v353 = vshrl.u32 %v352, 7
        %v354 = vsub.s32 %v351, %v353
        %v355 = vrot.slane %v347, %v354
        %v357 = vunpack.c.l.s4 1934713408
        %v358 = vunpack.c.0.s8 %v357
        %v359 = vlaneseq
        %v360 = vshrl.u32 %v359, 7
        %v361 = vsub.s32 %v358, %v360
        %v362 = vrot.slane %v348, %v361
        %v363 = vcombine.low %v339, %v355
        %v364 = vcombine.high %v339, %v355
        %v365 = vcombine.low %v346, %v362
        %v366 = vcombine.high %v346, %v362
        %v367 = vcombine.low %v271, %v278
        %v369 = vunpack.c.l.s4 1983009808
        %v370 = vunpack.c.0.s8 %v369
        %v371 = vlaneseq
        %v372 = vshrl.u32 %v371, 7
        %v373 = vsub.s32 %v370, %v372
        %v374 = vrot.slane %v367, %v373
        %v375 = vcombine.low %v295, %v296
        %v377 = vunpack.c.l.s4 1983009808
        %v378 = vunpack.c.0.s8 %v377
        %v379 = vlaneseq
        %v380 = vshrl.u32 %v379, 7
        %v381 = vsub.s32 %v378, %v380
        %v382 = vrot.slane %v375, %v381
        %v383 = vcombine.low %v287, %v294
        %v385 = vunpack.c.l.s4 1983009808
        %v386 = vunpack.c.0.s8 %v385
        %v387 = vlaneseq
        %v388 = vshrl.u32 %v387, 7
        %v389 = vsub.s32 %v386, %v388
        %v390 = vrot.slane %v383, %v389
        %v391 = vcombine.low %v297, %v298
        %v393 = vunpack.c.l.s4 1983009808
        %v394 = vunpack.c.0.s8 %v393
        %v395 = vlaneseq
        %v396 = vshrl.u32 %v395, 7
        %v397 = vsub.s32 %v394, %v396
        %v398 = vrot.slane %v391, %v397
        %v399 = vcombine.low %v374, %v382
        %v400 = vcombine.high %v374, %v382
        %v402 = vunpack.c.l.s4 1934713408
        %v403 = vunpack.c.0.s8 %v402
        %v404 = vlaneseq
        %v405 = vshrl.u32 %v404, 7
        %v406 = vsub.s32 %v403, %v405
        %v407 = vrot.slane %v399, %v406
        %v409 = vunpack.c.l.s4 1934713408
        %v410 = vunpack.c.0.s8 %v409
        %v411 = vlaneseq
        %v412 = vshrl.u32 %v411, 7
        %v413 = vsub.s32 %v410, %v412
        %v414 = vrot.slane %v400, %v413
        %v415 = vcombine.low %v390, %v398
        %v416 = vcombine.high %v390, %v398
        %v418 = vunpack.c.l.s4 1934713408
        %v419 = vunpack.c.0.s8 %v418
        %v420 = vlaneseq
        %v421 = vshrl.u32 %v420, 7
        %v422 = vsub.s32 %v419, %v421
        %v423 = vrot.slane %v415, %v422
        %v425 = vunpack.c.l.s4 1934713408
        %v426 = vunpack.c.0.s8 %v425
        %v427 = vlaneseq
        %v428 = vshrl.u32 %v427, 7
        %v429 = vsub.s32 %v426, %v428
        %v430 = vrot.slane %v416, %v429
        %v431 = vcombine.low %v407, %v423
        %v432 = vcombine.high %v407, %v423
        %v433 = vcombine.low %v414, %v430
        %v434 = vcombine.high %v414, %v430
        %437 = vrot.lane.b32.xlu0 %v364, 16
        %v438 = vpop.permute.xlu0 %437
        %439 = vrot.lane.b32.xlu0 %v432, 16
        %v440 = vpop.permute.xlu0 %439
        %445 = vrot.lane.b32.xlu0 %v365, 32
        %v446 = vpop.permute.xlu0 %445
        %447 = vrot.lane.b32.xlu0 %v433, 32
        %v448 = vpop.permute.xlu0 %447
        %453 = vrot.lane.b32.xlu0 %v366, 48
        %v454 = vpop.permute.xlu0 %453
        %455 = vrot.lane.b32.xlu0 %v434, 48
        %v456 = vpop.permute.xlu0 %455
        %vm459 = vcmask 130048
        %v460 = vsel %vm459, %v363, %v438
        %v461 = vsel %vm459, %v431, %v440
        %vm462 = vcmask 261120
        %v463 = vsel %vm462, %v460, %v446
        %v464 = vsel %vm462, %v461, %v448
        %vm465 = vcmask 392192
        %v466 = vsel %vm465, %v463, %v454
        %v467 = vsel %vm465, %v464, %v456
        %vm468 = vcmask 523264
        %469 = vst.msk [vmem:[%s152] sm:$0xff] %vm468, %v466
        %470 = vst.msk [vmem:[%s152 + $0x8] sm:$0xff] %vm468, %v467
        %s471 = sand.u32 %s68, 1
        %s472 = scalar_lea.sflag [#allocation4], %s471
        %s473 = sand.u32 %s68, 1
        %s474 = smul.addr %s473, 16
        %s475 = scalar_lea.vmem [#allocation5], %s474
        // Predicated region
        $region29: #{tpu_custom_call.1} parent=23 // pred_check
          %p476 = pneg %p78
        $region30: #{tpu_custom_call.1} parent=23 // pred_check_branch
          %478 = sbr.rel (%p476) target = $region32
        $region31: #{tpu_custom_call.1} parent=23 // pred_region
          %s479 = smul.u32 2, %s23
          %s481 = ssub.s32 256, 256
          %482 = vsyncadd %s472, %s481
          %s483 = smul.addr %s22, 2
          %s484 = sadd.s32 %s479, %s483
          %s485 = smul.addr %s484, 128
          %s486 = scalar_lea.hbm %s1, %s485
          %s487 = sshll.u32 %s475, 4
          %s488 = int_to_ptr.vmem [resolvable:$true] %s487
          %493 = dma.vmem_to_hbm [thread:$0]  %s488, 256, %s486, %s472, 128, 128, 8
        $region32: #{tpu_custom_call.1} parent=23 // pred_fallthru
          _
      $region24: #{tpu_custom_call.1} parent=5 // pred_fallthru
        _
      %p494 = scmp.le.s32.totalorder 2, %s13
      // Predicated region
      $region33: #{tpu_custom_call.1} parent=5 // pred_check
        %p495 = pneg %p494
      $region34: #{tpu_custom_call.1} parent=5 // pred_check_branch
        %497 = sbr.rel (%p495) target = $region36
      $region35: #{tpu_custom_call.1} parent=5 // pred_region
        %s498 = ssub.s32 %s13, 2
        // Predicated region
        $region37: #{tpu_custom_call.1} parent=35 // pred_check
          %p499 = pneg %p84
        $region38: #{tpu_custom_call.1} parent=35 // pred_check_branch
          %501 = sbr.rel (%p499) target = $region40
        $region39: #{tpu_custom_call.1} parent=35 // pred_region
          %s502 = sand.u32 %s69, 1
          %s503 = scalar_lea.sflag [#allocation4], %s502
          %s504 = sand.u32 %s69, 1
          %s505 = smul.addr %s504, 16
          %s506 = scalar_lea.vmem [#allocation5], %s505
          %507 = dma.done %s503, 256
        $region40: #{tpu_custom_call.1} parent=35 // pred_fallthru
          _
      $region36: #{tpu_custom_call.1} parent=5 // pred_fallthru
        _
    $region6: #{tpu_custom_call.1} parent=1 // loop_footer
      %s17 = sadd.s32 1, %s13
    $region7: #{tpu_custom_call.1} parent=1 // loop_footer_branch
      %12 = sbr.rel target = $region3
    $region8: #{tpu_custom_call.1} parent=1 // loop_exit
      _
    %508 = vsyncpa [#allocation3], 1
    %s509 = scalar_lea.sflag [#allocation3], 1
    %510 = vsyncpa %s509, 1
    %511 = vsyncpa [#allocation4], 1
    %s512 = scalar_lea.sflag [#allocation4], 1
    %513 = vsyncpa %s512, 1

</llo_original>
